<compile_context>
chip_gen: v7x
topology: tpu7x:2x2x1
jax: 0.10.0
libtpu: 0.0.40
codegen_flags: <defaults>
</compile_context>

<pallas_src>
import jax
import jax.numpy as jnp
from jax import lax
from jax.experimental import pallas as pl
from jax.experimental.pallas import tpu as pltpu


# ----------------------------------------------------------------------------
# In-kernel math helpers (traced inside the Pallas kernel)
# ----------------------------------------------------------------------------
def _erf(x):
    """erf via Abramowitz & Stegun 7.1.26 (|err| < 1.5e-7 with exact divide).

    The 1/(1+p*|x|) divide is routed to the EUP via pl.reciprocal(approx=True)
    so it co-issues with the VALU polynomial instead of occupying it.
    """
    a1 = jnp.float32(0.254829592)
    a2 = jnp.float32(-0.284496736)
    a3 = jnp.float32(1.421413741)
    a4 = jnp.float32(-1.453152027)
    a5 = jnp.float32(1.061405429)
    p = jnp.float32(0.3275911)
    ax = jnp.abs(x)
    t = pl.reciprocal(1.0 + p * ax, approx=True)          # EUP slot
    poly = ((((a5 * t + a4) * t + a3) * t + a2) * t + a1) * t
    y = 1.0 - poly * jnp.exp(-ax * ax)                     # exp -> EUP slot
    return jnp.where(x >= 0, y, -y)


def _ln_gelu(h, gamma, beta):
    """LayerNorm (eps=1e-5, biased variance) followed by exact-form GELU."""
    mean = jnp.mean(h, axis=-1, keepdims=True)
    cent = h - mean
    var = jnp.mean(cent * cent, axis=-1, keepdims=True)
    hn = cent * lax.rsqrt(var + jnp.float32(1e-5))         # rsqrt -> EUP slot
    hn = hn * gamma + beta
    return 0.5 * hn * (1.0 + _erf(hn * jnp.float32(0.7071067811865476)))


# ----------------------------------------------------------------------------
# Fused kernel: concat + all hidden layers + final projection in one body
# ----------------------------------------------------------------------------
def _make_mlp_kernel(num_hidden):
    """Build a kernel for `num_hidden` hidden layers (static Python int).

    Ref order: inp, cond,
               w1_inp, w1_cond, b1, gamma1, beta1,            (first hidden)
               [w_i, b_i, gamma_i, beta_i] * (num_hidden-1),  (other hiddens)
               w_final, b_final,
               out_ref
    Weight refs are bf16 (in, out); biases / LN params are f32.
    """

    def kernel(*refs):
        *in_refs, o_ref = refs
        it = iter(in_refs)
        nxt = lambda: next(it)[...]

        inp = nxt()
        cond = nxt()

        # --- first hidden layer: concat fused as split matmul ---------------
        w1a, w1b, b1, g1, bt1 = nxt(), nxt(), nxt(), nxt(), nxt()
        h = (
            jnp.dot(inp.astype(w1a.dtype), w1a, preferred_element_type=jnp.float32)
            + jnp.dot(cond.astype(w1b.dtype), w1b, preferred_element_type=jnp.float32)
            + b1
        )
        x = _ln_gelu(h, g1, bt1)  # dropout == identity (inference)

        # --- remaining hidden layers -----------------------------------------
        for _ in range(num_hidden - 1):
            w, b, g, bt = nxt(), nxt(), nxt(), nxt()
            h = jnp.dot(x.astype(w.dtype), w, preferred_element_type=jnp.float32) + b
            x = _ln_gelu(h, g, bt)

        # --- final projection -------------------------------------------------
        wf, bf = nxt(), nxt()
        out = jnp.dot(x.astype(wf.dtype), wf, preferred_element_type=jnp.float32) + bf
        o_ref[...] = out.astype(o_ref.dtype)

    return kernel


# ----------------------------------------------------------------------------
# pallas_call wrapper: grid-less for small batch, 1-D "parallel" batch grid
# (params resident) for large batch.
# ----------------------------------------------------------------------------
def _cost_estimate(batch, flat_params, num_hidden, in_elems, out_elems):
    w1a, w1b = flat_params[0], flat_params[1]
    h1 = w1a.shape[1]
    flops = 2 * batch * (w1a.shape[0] + w1b.shape[0]) * h1
    hidden_elems = batch * h1
    idx = 5
    for _ in range(num_hidden - 1):
        w = flat_params[idx]
        flops += 2 * batch * w.shape[0] * w.shape[1]
        hidden_elems += batch * w.shape[1]
        idx += 4
    wf = flat_params[idx]
    flops += 2 * batch * wf.shape[0] * wf.shape[1]
    param_bytes = sum(int(p.size) * p.dtype.itemsize for p in flat_params)
    bytes_accessed = (in_elems + out_elems) * 4 + param_bytes
    # exp + approx-reciprocal per hidden element (rsqrt per row is negligible)
    return pl.CostEstimate(
        flops=int(flops),
        transcendentals=int(2 * hidden_elems),
        bytes_accessed=int(bytes_accessed),
    )


def _mlp_pallas(inp, cond, flat_params, *, num_hidden, block_rows=1024):
    assert block_rows % 8 == 0, "block_rows must be a sublane multiple"
    batch, cd = inp.shape
    dd = cond.shape[1]
    out_dim = flat_params[-1].shape[-1]  # final bias -> control_dim
    kernel = _make_mlp_kernel(num_hidden)
    cost = _cost_estimate(
        batch, flat_params, num_hidden,
        in_elems=inp.size + cond.size, out_elems=batch * out_dim,
    )

    if batch <= block_rows:
        # Small batch: one shot, everything as whole-array VMEM blocks
        # (~30 KiB params + tiny activations; no pipelining overhead).
        vmem = pl.BlockSpec(memory_space=pltpu.MemorySpace.VMEM)
        return pl.pallas_call(
            kernel,
            out_shape=jax.ShapeDtypeStruct((batch, out_dim), jnp.float32),
            in_specs=[vmem] * (2 + len(flat_params)),
            out_specs=vmem,
            cost_estimate=cost,
        )(inp, cond, *flat_params)

    # Large batch: 1-D grid over rows; weights stay resident (block index 0),
    # batch axis marked "parallel" (megacore sharding on v7x).
    pad = (-batch) % block_rows
    if pad:
        inp = jnp.pad(inp, ((0, pad), (0, 0)))
        cond = jnp.pad(cond, ((0, pad), (0, 0)))
    pbatch = batch + pad
    grid = (pbatch // block_rows,)

    def rows(cols):
        return pl.BlockSpec((block_rows, cols), lambda i: (i, 0))

    param_specs = [pl.BlockSpec(p.shape, lambda i: (0, 0)) for p in flat_params]
    out = pl.pallas_call(
        kernel,
        out_shape=jax.ShapeDtypeStruct((pbatch, out_dim), jnp.float32),
        grid=grid,
        in_specs=[rows(cd), rows(dd), *param_specs],
        out_specs=rows(out_dim),
        compiler_params=pltpu.CompilerParams(dimension_semantics=("parallel",)),
        cost_estimate=cost,
    )(inp, cond, *flat_params)
    return out[:batch] if pad else out


# num_hidden / block_rows are the only non-array arguments -> static.
mlp_forward = jax.jit(_mlp_pallas, static_argnames=("num_hidden", "block_rows"))


# ----------------------------------------------------------------------------
# Parameter construction (arrays only — jit/pytree friendly)
# ----------------------------------------------------------------------------
def init_params(key, control_dim, drug_dim, hidden_dims):
    """Returns (hidden_layers, final) where hidden_layers is a list of
    (w, b, gamma, beta) and final is (w, b).  Weights are (in, out), f32."""
    hidden = []
    in_f = control_dim + drug_dim
    for h in hidden_dims:
        key, kw, kb = jax.random.split(key, 3)
        bound = 1.0 / (in_f ** 0.5)
        w = jax.random.uniform(kw, (in_f, h), jnp.float32, -bound, bound)
        b = jax.random.uniform(kb, (1, h), jnp.float32, -bound, bound)
        hidden.append(
            (w, b, jnp.ones((1, h), jnp.float32), jnp.zeros((1, h), jnp.float32))
        )
        in_f = h
    key, kw, kb = jax.random.split(key, 3)
    bound = 1.0 / (in_f ** 0.5)
    wf = jax.random.uniform(kw, (in_f, control_dim), jnp.float32, -bound, bound)
    bf = jax.random.uniform(kb, (1, control_dim), jnp.float32, -bound, bound)
    return hidden, (wf, bf)


def flatten_params(hidden, final, control_dim, weight_dtype=jnp.bfloat16):
    """Flatten to the tuple-of-arrays layout the fused kernel expects.
    The first hidden weight is pre-split at row `control_dim` (fused concat);
    weight matrices are cast to bf16 (MXU-native), biases/LN params stay f32."""
    (w1, b1, g1, bt1), *rest = hidden
    flat = [
        w1[:control_dim].astype(weight_dtype),
        w1[control_dim:].astype(weight_dtype),
        b1, g1, bt1,
    ]
    for w, b, g, bt in rest:
        flat.extend([w.astype(weight_dtype), b, g, bt])
    wf, bf = final
    flat.extend([wf.astype(weight_dtype), bf])
    return tuple(flat)


# ----------------------------------------------------------------------------
# Pure-JAX references for validation
# ----------------------------------------------------------------------------
def mlp_forward_ref(inp, cond, hidden, final, matmul_dtype=None):
    """matmul_dtype=jnp.bfloat16 mimics the kernel's MXU operand dtype
    (f32 accumulation); None = full-f32 PyTorch-parity reference."""
    def dot(a, b):
        if matmul_dtype is None:
            return jnp.dot(a, b, precision=lax.Precision.HIGHEST)
        return jnp.dot(a.astype(matmul_dtype), b.astype(matmul_dtype),
                       preferred_element_type=jnp.float32)

    x = jnp.concatenate([inp, cond], axis=-1)
    for w, b, g, bt in hidden:
        h = dot(x, w) + b
        mean = jnp.mean(h, axis=-1, keepdims=True)
        var = jnp.mean((h - mean) ** 2, axis=-1, keepdims=True)
        hn = (h - mean) / jnp.sqrt(var + 1e-5) * g + bt
        x = 0.5 * hn * (1.0 + lax.erf(hn / jnp.sqrt(2.0)))
    wf, bf = final
    return dot(x, wf) + bf


if __name__ == "__main__":
    # config: control_dim=32, drug_emb_dim=16, mlp_hidden_dims=[64, 32], dropout=0.1
    control_dim, drug_dim = 32, 16
    hidden_dims = [64, 32]

    key = jax.random.PRNGKey(0)
    k_in, k_cond, k_params = jax.random.split(key, 3)
    hidden, final = init_params(k_params, control_dim, drug_dim, hidden_dims)
    flat_params = flatten_params(hidden, final, control_dim)

    # ---- small batch: grid-less whole-array path --------------------------
    batch = 8
    inp = jax.random.normal(k_in, (batch, control_dim), jnp.float32)
    cond = jax.random.normal(k_cond, (batch, drug_dim), jnp.float32)
    out = jax.block_until_ready(
        mlp_forward(inp, cond, flat_params, num_hidden=len(hidden_dims))
    )
    assert out.shape == (batch, control_dim)
    ref_bf16 = mlp_forward_ref(inp, cond, hidden, final, matmul_dtype=jnp.bfloat16)
    ref_f32 = mlp_forward_ref(inp, cond, hidden, final)
    assert jnp.allclose(out, ref_bf16, atol=1e-2, rtol=1e-2), (
        float(jnp.max(jnp.abs(out - ref_bf16)))
    )
    assert jnp.allclose(out, ref_f32, atol=5e-2, rtol=5e-2), (
        float(jnp.max(jnp.abs(out - ref_f32)))
    )

    # ---- larger batch: exercises the 1-D "parallel" batch grid ------------
    batch_big = 512
    inp_b = jax.random.normal(k_in, (batch_big, control_dim), jnp.float32)
    cond_b = jax.random.normal(k_cond, (batch_big, drug_dim), jnp.float32)
    out_b = jax.block_until_ready(
        mlp_forward(inp_b, cond_b, flat_params,
                    num_hidden=len(hidden_dims), block_rows=256)
    )
    ref_b = mlp_forward_ref(inp_b, cond_b, hidden, final, matmul_dtype=jnp.bfloat16)
    assert out_b.shape == (batch_big, control_dim)
    assert jnp.allclose(out_b, ref_b, atol=1e-2, rtol=1e-2), (
        float(jnp.max(jnp.abs(out_b - ref_b)))
    )

    print("KERNEL_OK")
</pallas_src>

<mosaic_0001>
module attributes {stable_mosaic.version = 11 : i64} {
  func.func @kernel(%arg0: memref<8x32xf32, #tpu.memory_space<vmem>>, %arg1: memref<8x16xf32, #tpu.memory_space<vmem>>, %arg2: memref<32x64xbf16, #tpu.memory_space<vmem>>, %arg3: memref<16x64xbf16, #tpu.memory_space<vmem>>, %arg4: memref<1x64xf32, #tpu.memory_space<vmem>>, %arg5: memref<1x64xf32, #tpu.memory_space<vmem>>, %arg6: memref<1x64xf32, #tpu.memory_space<vmem>>, %arg7: memref<64x32xbf16, #tpu.memory_space<vmem>>, %arg8: memref<1x32xf32, #tpu.memory_space<vmem>>, %arg9: memref<1x32xf32, #tpu.memory_space<vmem>>, %arg10: memref<1x32xf32, #tpu.memory_space<vmem>>, %arg11: memref<32x32xbf16, #tpu.memory_space<vmem>>, %arg12: memref<1x32xf32, #tpu.memory_space<vmem>>, %arg13: memref<8x32xf32, #tpu.memory_space<vmem>>) attributes {dimension_semantics = [], scalar_prefetch = 0 : i64, scratch_operands = 0 : i64, tpu.core_type = #tpu.core_type<tc>} {
    %c0 = arith.constant 0 : index
    %c0_0 = arith.constant 0 : index
    %0 = vector.load %arg0[%c0, %c0_0] : memref<8x32xf32, #tpu.memory_space<vmem>>, vector<8x32xf32>
    %c0_1 = arith.constant 0 : index
    %c0_2 = arith.constant 0 : index
    %1 = vector.load %arg1[%c0_1, %c0_2] : memref<8x16xf32, #tpu.memory_space<vmem>>, vector<8x16xf32>
    %c0_3 = arith.constant 0 : index
    %c0_4 = arith.constant 0 : index
    %2 = vector.load %arg2[%c0_3, %c0_4] : memref<32x64xbf16, #tpu.memory_space<vmem>>, vector<32x64xbf16>
    %c0_5 = arith.constant 0 : index
    %c0_6 = arith.constant 0 : index
    %3 = vector.load %arg3[%c0_5, %c0_6] : memref<16x64xbf16, #tpu.memory_space<vmem>>, vector<16x64xbf16>
    %c0_7 = arith.constant 0 : index
    %c0_8 = arith.constant 0 : index
    %4 = vector.load %arg4[%c0_7, %c0_8] : memref<1x64xf32, #tpu.memory_space<vmem>>, vector<1x64xf32>
    %c0_9 = arith.constant 0 : index
    %c0_10 = arith.constant 0 : index
    %5 = vector.load %arg5[%c0_9, %c0_10] : memref<1x64xf32, #tpu.memory_space<vmem>>, vector<1x64xf32>
    %c0_11 = arith.constant 0 : index
    %c0_12 = arith.constant 0 : index
    %6 = vector.load %arg6[%c0_11, %c0_12] : memref<1x64xf32, #tpu.memory_space<vmem>>, vector<1x64xf32>
    %7 = arith.truncf %0 : vector<8x32xf32> to vector<8x32xbf16>
    %cst = arith.constant dense<0.000000e+00> : vector<8x64xf32>
    %8 = tpu.matmul %7, %2, %cst {dimension_numbers = #tpu.dot_dimension_numbers<[1], [0], [0], [1], [0, 0, 1, 1], [], []>} : vector<8x32xbf16>, vector<32x64xbf16>, vector<8x64xf32> -> vector<8x64xf32>
    %9 = arith.truncf %1 : vector<8x16xf32> to vector<8x16xbf16>
    %cst_13 = arith.constant dense<0.000000e+00> : vector<8x64xf32>
    %10 = tpu.matmul %9, %3, %cst_13 {dimension_numbers = #tpu.dot_dimension_numbers<[1], [0], [0], [1], [0, 0, 1, 1], [], []>} : vector<8x16xbf16>, vector<16x64xbf16>, vector<8x64xf32> -> vector<8x64xf32>
    %11 = arith.addf %8, %10 : vector<8x64xf32>
    %12 = vector.broadcast %4 : vector<1x64xf32> to vector<8x64xf32>
    %13 = arith.addf %11, %12 : vector<8x64xf32>
    %cst_14 = arith.constant dense<0.000000e+00> : vector<8xf32>
    %14 = vector.multi_reduction <add>, %13, %cst_14 [1] : vector<8x64xf32> to vector<8xf32>
    %15 = vector.shape_cast %14 : vector<8xf32> to vector<8x1xf32>
    %cst_15 = arith.constant 6.400000e+01 : f32
    %16 = vector.broadcast %cst_15 : f32 to vector<8x1xf32>
    %17 = arith.divf %15, %16 : vector<8x1xf32>
    %18 = vector.broadcast %17 : vector<8x1xf32> to vector<8x64xf32>
    %19 = arith.subf %13, %18 : vector<8x64xf32>
    %20 = arith.mulf %19, %19 : vector<8x64xf32>
    %cst_16 = arith.constant dense<0.000000e+00> : vector<8xf32>
    %21 = vector.multi_reduction <add>, %20, %cst_16 [1] : vector<8x64xf32> to vector<8xf32>
    %22 = vector.shape_cast %21 : vector<8xf32> to vector<8x1xf32>
    %cst_17 = arith.constant 6.400000e+01 : f32
    %23 = vector.broadcast %cst_17 : f32 to vector<8x1xf32>
    %24 = arith.divf %22, %23 : vector<8x1xf32>
    %cst_18 = arith.constant 9.99999974E-6 : f32
    %25 = vector.broadcast %cst_18 : f32 to vector<8x1xf32>
    %26 = arith.addf %24, %25 : vector<8x1xf32>
    %27 = math.rsqrt %26 : vector<8x1xf32>
    %28 = vector.broadcast %27 : vector<8x1xf32> to vector<8x64xf32>
    %29 = arith.mulf %19, %28 : vector<8x64xf32>
    %30 = vector.broadcast %5 : vector<1x64xf32> to vector<8x64xf32>
    %31 = arith.mulf %29, %30 : vector<8x64xf32>
    %32 = vector.broadcast %6 : vector<1x64xf32> to vector<8x64xf32>
    %33 = arith.addf %31, %32 : vector<8x64xf32>
    %cst_19 = arith.constant 5.000000e-01 : f32
    %34 = vector.broadcast %cst_19 : f32 to vector<8x64xf32>
    %35 = arith.mulf %34, %33 : vector<8x64xf32>
    %cst_20 = arith.constant 0.707106769 : f32
    %36 = vector.broadcast %cst_20 : f32 to vector<8x64xf32>
    %37 = arith.mulf %33, %36 : vector<8x64xf32>
    %38 = math.absf %37 : vector<8x64xf32>
    %cst_21 = arith.constant 0.327591091 : f32
    %39 = vector.broadcast %cst_21 : f32 to vector<8x64xf32>
    %40 = arith.mulf %39, %38 : vector<8x64xf32>
    %cst_22 = arith.constant 1.000000e+00 : f32
    %41 = vector.broadcast %cst_22 : f32 to vector<8x64xf32>
    %42 = arith.addf %41, %40 : vector<8x64xf32>
    %43 = tpu.reciprocal %42 {approx = true} : vector<8x64xf32> -> vector<8x64xf32>
    %cst_23 = arith.constant 1.06140542 : f32
    %44 = vector.broadcast %cst_23 : f32 to vector<8x64xf32>
    %45 = arith.mulf %44, %43 : vector<8x64xf32>
    %cst_24 = arith.constant -1.45315206 : f32
    %46 = vector.broadcast %cst_24 : f32 to vector<8x64xf32>
    %47 = arith.addf %45, %46 : vector<8x64xf32>
    %48 = arith.mulf %47, %43 : vector<8x64xf32>
    %cst_25 = arith.constant 1.42141378 : f32
    %49 = vector.broadcast %cst_25 : f32 to vector<8x64xf32>
    %50 = arith.addf %48, %49 : vector<8x64xf32>
    %51 = arith.mulf %50, %43 : vector<8x64xf32>
    %cst_26 = arith.constant -0.284496725 : f32
    %52 = vector.broadcast %cst_26 : f32 to vector<8x64xf32>
    %53 = arith.addf %51, %52 : vector<8x64xf32>
    %54 = arith.mulf %53, %43 : vector<8x64xf32>
    %cst_27 = arith.constant 0.254829586 : f32
    %55 = vector.broadcast %cst_27 : f32 to vector<8x64xf32>
    %56 = arith.addf %54, %55 : vector<8x64xf32>
    %57 = arith.mulf %56, %43 : vector<8x64xf32>
    %cst_28 = arith.constant 0.000000e+00 : f32
    %58 = vector.broadcast %cst_28 : f32 to vector<8x64xf32>
    %59 = arith.subf %58, %38 : vector<8x64xf32>
    %60 = arith.mulf %59, %38 : vector<8x64xf32>
    %61 = math.exp %60 : vector<8x64xf32>
    %62 = arith.mulf %57, %61 : vector<8x64xf32>
    %cst_29 = arith.constant 1.000000e+00 : f32
    %63 = vector.broadcast %cst_29 : f32 to vector<8x64xf32>
    %64 = arith.subf %63, %62 : vector<8x64xf32>
    %cst_30 = arith.constant 0.000000e+00 : f32
    %65 = vector.broadcast %cst_30 : f32 to vector<8x64xf32>
    %66 = arith.cmpf oge, %37, %65 : vector<8x64xf32>
    %cst_31 = arith.constant 0.000000e+00 : f32
    %67 = vector.broadcast %cst_31 : f32 to vector<8x64xf32>
    %68 = arith.subf %67, %64 : vector<8x64xf32>
    %69 = arith.select %66, %64, %68 : vector<8x64xi1>, vector<8x64xf32>
    %cst_32 = arith.constant 1.000000e+00 : f32
    %70 = vector.broadcast %cst_32 : f32 to vector<8x64xf32>
    %71 = arith.addf %70, %69 : vector<8x64xf32>
    %72 = arith.mulf %35, %71 : vector<8x64xf32>
    %c0_33 = arith.constant 0 : index
    %c0_34 = arith.constant 0 : index
    %73 = vector.load %arg7[%c0_33, %c0_34] : memref<64x32xbf16, #tpu.memory_space<vmem>>, vector<64x32xbf16>
    %c0_35 = arith.constant 0 : index
    %c0_36 = arith.constant 0 : index
    %74 = vector.load %arg8[%c0_35, %c0_36] : memref<1x32xf32, #tpu.memory_space<vmem>>, vector<1x32xf32>
    %c0_37 = arith.constant 0 : index
    %c0_38 = arith.constant 0 : index
    %75 = vector.load %arg9[%c0_37, %c0_38] : memref<1x32xf32, #tpu.memory_space<vmem>>, vector<1x32xf32>
    %c0_39 = arith.constant 0 : index
    %c0_40 = arith.constant 0 : index
    %76 = vector.load %arg10[%c0_39, %c0_40] : memref<1x32xf32, #tpu.memory_space<vmem>>, vector<1x32xf32>
    %77 = arith.truncf %72 : vector<8x64xf32> to vector<8x64xbf16>
    %cst_41 = arith.constant dense<0.000000e+00> : vector<8x32xf32>
    %78 = tpu.matmul %77, %73, %cst_41 {dimension_numbers = #tpu.dot_dimension_numbers<[1], [0], [0], [1], [0, 0, 1, 1], [], []>} : vector<8x64xbf16>, vector<64x32xbf16>, vector<8x32xf32> -> vector<8x32xf32>
    %79 = vector.broadcast %74 : vector<1x32xf32> to vector<8x32xf32>
    %80 = arith.addf %78, %79 : vector<8x32xf32>
    %cst_42 = arith.constant dense<0.000000e+00> : vector<8xf32>
    %81 = vector.multi_reduction <add>, %80, %cst_42 [1] : vector<8x32xf32> to vector<8xf32>
    %82 = vector.shape_cast %81 : vector<8xf32> to vector<8x1xf32>
    %cst_43 = arith.constant 3.200000e+01 : f32
    %83 = vector.broadcast %cst_43 : f32 to vector<8x1xf32>
    %84 = arith.divf %82, %83 : vector<8x1xf32>
    %85 = vector.broadcast %84 : vector<8x1xf32> to vector<8x32xf32>
    %86 = arith.subf %80, %85 : vector<8x32xf32>
    %87 = arith.mulf %86, %86 : vector<8x32xf32>
    %cst_44 = arith.constant dense<0.000000e+00> : vector<8xf32>
    %88 = vector.multi_reduction <add>, %87, %cst_44 [1] : vector<8x32xf32> to vector<8xf32>
    %89 = vector.shape_cast %88 : vector<8xf32> to vector<8x1xf32>
    %cst_45 = arith.constant 3.200000e+01 : f32
    %90 = vector.broadcast %cst_45 : f32 to vector<8x1xf32>
    %91 = arith.divf %89, %90 : vector<8x1xf32>
    %cst_46 = arith.constant 9.99999974E-6 : f32
    %92 = vector.broadcast %cst_46 : f32 to vector<8x1xf32>
    %93 = arith.addf %91, %92 : vector<8x1xf32>
    %94 = math.rsqrt %93 : vector<8x1xf32>
    %95 = vector.broadcast %94 : vector<8x1xf32> to vector<8x32xf32>
    %96 = arith.mulf %86, %95 : vector<8x32xf32>
    %97 = vector.broadcast %75 : vector<1x32xf32> to vector<8x32xf32>
    %98 = arith.mulf %96, %97 : vector<8x32xf32>
    %99 = vector.broadcast %76 : vector<1x32xf32> to vector<8x32xf32>
    %100 = arith.addf %98, %99 : vector<8x32xf32>
    %cst_47 = arith.constant 5.000000e-01 : f32
    %101 = vector.broadcast %cst_47 : f32 to vector<8x32xf32>
    %102 = arith.mulf %101, %100 : vector<8x32xf32>
    %cst_48 = arith.constant 0.707106769 : f32
    %103 = vector.broadcast %cst_48 : f32 to vector<8x32xf32>
    %104 = arith.mulf %100, %103 : vector<8x32xf32>
    %105 = math.absf %104 : vector<8x32xf32>
    %cst_49 = arith.constant 0.327591091 : f32
    %106 = vector.broadcast %cst_49 : f32 to vector<8x32xf32>
    %107 = arith.mulf %106, %105 : vector<8x32xf32>
    %cst_50 = arith.constant 1.000000e+00 : f32
    %108 = vector.broadcast %cst_50 : f32 to vector<8x32xf32>
    %109 = arith.addf %108, %107 : vector<8x32xf32>
    %110 = tpu.reciprocal %109 {approx = true} : vector<8x32xf32> -> vector<8x32xf32>
    %cst_51 = arith.constant 1.06140542 : f32
    %111 = vector.broadcast %cst_51 : f32 to vector<8x32xf32>
    %112 = arith.mulf %111, %110 : vector<8x32xf32>
    %cst_52 = arith.constant -1.45315206 : f32
    %113 = vector.broadcast %cst_52 : f32 to vector<8x32xf32>
    %114 = arith.addf %112, %113 : vector<8x32xf32>
    %115 = arith.mulf %114, %110 : vector<8x32xf32>
    %cst_53 = arith.constant 1.42141378 : f32
    %116 = vector.broadcast %cst_53 : f32 to vector<8x32xf32>
    %117 = arith.addf %115, %116 : vector<8x32xf32>
    %118 = arith.mulf %117, %110 : vector<8x32xf32>
    %cst_54 = arith.constant -0.284496725 : f32
    %119 = vector.broadcast %cst_54 : f32 to vector<8x32xf32>
    %120 = arith.addf %118, %119 : vector<8x32xf32>
    %121 = arith.mulf %120, %110 : vector<8x32xf32>
    %cst_55 = arith.constant 0.254829586 : f32
    %122 = vector.broadcast %cst_55 : f32 to vector<8x32xf32>
    %123 = arith.addf %121, %122 : vector<8x32xf32>
    %124 = arith.mulf %123, %110 : vector<8x32xf32>
    %cst_56 = arith.constant 0.000000e+00 : f32
    %125 = vector.broadcast %cst_56 : f32 to vector<8x32xf32>
    %126 = arith.subf %125, %105 : vector<8x32xf32>
    %127 = arith.mulf %126, %105 : vector<8x32xf32>
    %128 = math.exp %127 : vector<8x32xf32>
    %129 = arith.mulf %124, %128 : vector<8x32xf32>
    %cst_57 = arith.constant 1.000000e+00 : f32
    %130 = vector.broadcast %cst_57 : f32 to vector<8x32xf32>
    %131 = arith.subf %130, %129 : vector<8x32xf32>
    %cst_58 = arith.constant 0.000000e+00 : f32
    %132 = vector.broadcast %cst_58 : f32 to vector<8x32xf32>
    %133 = arith.cmpf oge, %104, %132 : vector<8x32xf32>
    %cst_59 = arith.constant 0.000000e+00 : f32
    %134 = vector.broadcast %cst_59 : f32 to vector<8x32xf32>
    %135 = arith.subf %134, %131 : vector<8x32xf32>
    %136 = arith.select %133, %131, %135 : vector<8x32xi1>, vector<8x32xf32>
    %cst_60 = arith.constant 1.000000e+00 : f32
    %137 = vector.broadcast %cst_60 : f32 to vector<8x32xf32>
    %138 = arith.addf %137, %136 : vector<8x32xf32>
    %139 = arith.mulf %102, %138 : vector<8x32xf32>
    %c0_61 = arith.constant 0 : index
    %c0_62 = arith.constant 0 : index
    %140 = vector.load %arg11[%c0_61, %c0_62] : memref<32x32xbf16, #tpu.memory_space<vmem>>, vector<32x32xbf16>
    %c0_63 = arith.constant 0 : index
    %c0_64 = arith.constant 0 : index
    %141 = vector.load %arg12[%c0_63, %c0_64] : memref<1x32xf32, #tpu.memory_space<vmem>>, vector<1x32xf32>
    %142 = arith.truncf %139 : vector<8x32xf32> to vector<8x32xbf16>
    %cst_65 = arith.constant dense<0.000000e+00> : vector<8x32xf32>
    %143 = tpu.matmul %142, %140, %cst_65 {dimension_numbers = #tpu.dot_dimension_numbers<[1], [0], [0], [1], [0, 0, 1, 1], [], []>} : vector<8x32xbf16>, vector<32x32xbf16>, vector<8x32xf32> -> vector<8x32xf32>
    %144 = vector.broadcast %141 : vector<1x32xf32> to vector<8x32xf32>
    %145 = arith.addf %143, %144 : vector<8x32xf32>
    %c0_66 = arith.constant 0 : index
    %c0_67 = arith.constant 0 : index
    %146 = vector.load %arg13[%c0_66, %c0_67] : memref<8x32xf32, #tpu.memory_space<vmem>>, vector<8x32xf32>
    tpu.vector_store %arg13[%c0_66, %c0_67], %145 {strides = array<i32>} : memref<8x32xf32, #tpu.memory_space<vmem>>, vector<8x32xf32>,
    return
  }
}

</mosaic_0001>

<llo_original>
// kernel: _mlp_pallas.1
$region0: #{_mlp_pallas.1}
  #allocation0 [shape = 'u32[]', space=smem, size = 0x4, offset = 0x4, fixed_abs, tag = 'smem constant byte address 0x4 - core index']
  #allocation1 [shape = 'u32[144,128]{1,0:T(1,128)}', space=vmem, size = 0x12000, scoped, tag = 'internal scratch']
  %s0 = inlined_call_operand.vmem [shape: f32[8,32], index: 0, kind: input, shape index: {}]
  %s1 = inlined_call_operand.vmem [shape: f32[8,16], index: 1, kind: input, shape index: {}]
  %s2 = inlined_call_operand.vmem [shape: bf16[32,64], index: 2, kind: input, shape index: {}]
  %s3 = inlined_call_operand.vmem [shape: bf16[16,64], index: 3, kind: input, shape index: {}]
  %s4 = inlined_call_operand.vmem [shape: f32[1,64], index: 4, kind: input, shape index: {}]
  %s5 = inlined_call_operand.vmem [shape: f32[1,64], index: 5, kind: input, shape index: {}]
  %s6 = inlined_call_operand.hbm [shape: f32[1,64], index: 6, kind: input, shape index: {}]
  %s7 = inlined_call_operand.vmem [shape: bf16[64,32], index: 7, kind: input, shape index: {}]
  %s8 = inlined_call_operand.vmem [shape: f32[1,32], index: 8, kind: input, shape index: {}]
  %s9 = inlined_call_operand.vmem [shape: f32[1,32], index: 9, kind: input, shape index: {}]
  %s10 = inlined_call_operand.vmem [shape: f32[1,32], index: 10, kind: input, shape index: {}]
  %s11 = inlined_call_operand.vmem [shape: bf16[32,32], index: 11, kind: input, shape index: {}]
  %s12 = inlined_call_operand.vmem [shape: f32[1,32], index: 12, kind: input, shape index: {}]
  %s13 = inlined_call_operand.hbm [shape: f32[8,32], index: 13, kind: output, shape index: {}]
  %s14 = sld [smem:[#allocation0]]
  $region66: #{_mlp_pallas.1} parent=0
    _
  %s16 = ssub.s32 1, %s14
  %s17 = scalar_select 0, %s16, %s14
  $region1: #{_mlp_pallas.1} parent=0
    #allocation2 [shape = 'u8[512]{0}', space=vmem, size = 0x400, scoped, tag = 'input window, operand 6, single buffered']
    #allocation3 [shape = 's32[1]{0}', space=sflag, size = 0x4, scoped, tag = 'scoped memory for _mlp_pallas.1']
    #allocation4 [shape = 's32[1]{0}', space=sflag, size = 0x4, scoped, tag = 'scoped memory for _mlp_pallas.1']
    #allocation5 [shape = 'u8[4096]{0}', space=vmem, size = 0x1000, scoped, tag = 'output window, operand 0, single buffered']
    %18 = vsyncpa [#allocation3], 0
    %19 = vsyncpa [#allocation4], 0
    // Predicated region
    $region2: #{_mlp_pallas.1} parent=1 // pred_check
      _
    $region3: #{_mlp_pallas.1} parent=1 // pred_check_branch
      %21 = sbr.rel (0) target = $region5
    $region4: #{_mlp_pallas.1} parent=1 // pred_region
      _
    $region5: #{_mlp_pallas.1} parent=1 // pred_fallthru
      _
    // Predicated region
    $region6: #{_mlp_pallas.1} parent=1 // pred_check
      _
    $region7: #{_mlp_pallas.1} parent=1 // pred_check_branch
      %23 = sbr.rel (0) target = $region9
    $region8: #{_mlp_pallas.1} parent=1 // pred_region
      _
    $region9: #{_mlp_pallas.1} parent=1 // pred_fallthru
      _
    // Predicated region
    $region10: #{_mlp_pallas.1} parent=1 // pred_check
      _
    $region11: #{_mlp_pallas.1} parent=1 // pred_check_branch
      %25 = sbr.rel (0) target = $region13
    $region12: #{_mlp_pallas.1} parent=1 // pred_region
      _
    $region13: #{_mlp_pallas.1} parent=1 // pred_fallthru
      _
    // Predicated region
    $region14: #{_mlp_pallas.1} parent=1 // pred_check
      _
    $region15: #{_mlp_pallas.1} parent=1 // pred_check_branch
      %27 = sbr.rel (0) target = $region17
    $region16: #{_mlp_pallas.1} parent=1 // pred_region
      _
    $region17: #{_mlp_pallas.1} parent=1 // pred_fallthru
      _
    // Predicated region
    $region18: #{_mlp_pallas.1} parent=1 // pred_check
      _
    $region19: #{_mlp_pallas.1} parent=1 // pred_check_branch
      %29 = sbr.rel (0) target = $region21
    $region20: #{_mlp_pallas.1} parent=1 // pred_region
      _
    $region21: #{_mlp_pallas.1} parent=1 // pred_fallthru
      _
    // Predicated region
    $region22: #{_mlp_pallas.1} parent=1 // pred_check
      _
    $region23: #{_mlp_pallas.1} parent=1 // pred_check_branch
      %31 = sbr.rel (0) target = $region25
    $region24: #{_mlp_pallas.1} parent=1 // pred_region
      _
    $region25: #{_mlp_pallas.1} parent=1 // pred_fallthru
      _
    // Predicated region
    $region26: #{_mlp_pallas.1} parent=1 // pred_check
      _
    $region27: #{_mlp_pallas.1} parent=1 // pred_check_branch
      %33 = sbr.rel (0) target = $region29
    $region28: #{_mlp_pallas.1} parent=1 // pred_region
      %s35 = ssub.s32 16, 16
      %36 = vsyncadd [#allocation3], %s35
      %s38 = sshll.u32 [#allocation2], 4
      %s39 = int_to_ptr.vmem [resolvable:$true] %s38
      %41 = dma.hbm_to_vmem [thread:$0]  %s6, 16, %s39, [#allocation3]
    $region29: #{_mlp_pallas.1} parent=1 // pred_fallthru
      _
    // Predicated region
    $region30: #{_mlp_pallas.1} parent=1 // pred_check
      _
    $region31: #{_mlp_pallas.1} parent=1 // pred_check_branch
      %43 = sbr.rel (0) target = $region33
    $region32: #{_mlp_pallas.1} parent=1 // pred_region
      _
    $region33: #{_mlp_pallas.1} parent=1 // pred_fallthru
      _
    // Predicated region
    $region34: #{_mlp_pallas.1} parent=1 // pred_check
      _
    $region35: #{_mlp_pallas.1} parent=1 // pred_check_branch
      %45 = sbr.rel (0) target = $region37
    $region36: #{_mlp_pallas.1} parent=1 // pred_region
      _
    $region37: #{_mlp_pallas.1} parent=1 // pred_fallthru
      _
    // Predicated region
    $region38: #{_mlp_pallas.1} parent=1 // pred_check
      _
    $region39: #{_mlp_pallas.1} parent=1 // pred_check_branch
      %47 = sbr.rel (0) target = $region41
    $region40: #{_mlp_pallas.1} parent=1 // pred_region
      _
    $region41: #{_mlp_pallas.1} parent=1 // pred_fallthru
      _
    // Predicated region
    $region42: #{_mlp_pallas.1} parent=1 // pred_check
      _
    $region43: #{_mlp_pallas.1} parent=1 // pred_check_branch
      %49 = sbr.rel (0) target = $region45
    $region44: #{_mlp_pallas.1} parent=1 // pred_region
      _
    $region45: #{_mlp_pallas.1} parent=1 // pred_fallthru
      _
    // Predicated region
    $region46: #{_mlp_pallas.1} parent=1 // pred_check
      _
    $region47: #{_mlp_pallas.1} parent=1 // pred_check_branch
      %51 = sbr.rel (0) target = $region49
    $region48: #{_mlp_pallas.1} parent=1 // pred_region
      _
    $region49: #{_mlp_pallas.1} parent=1 // pred_fallthru
      _
    // Predicated region
    $region50: #{_mlp_pallas.1} parent=1 // pred_check
      _
    $region51: #{_mlp_pallas.1} parent=1 // pred_check_branch
      %53 = sbr.rel (0) target = $region53
    $region52: #{_mlp_pallas.1} parent=1 // pred_region
      _
    $region53: #{_mlp_pallas.1} parent=1 // pred_fallthru
      _
    // Predicated region
    $region54: #{_mlp_pallas.1} parent=1 // pred_check
      _
    $region55: #{_mlp_pallas.1} parent=1 // pred_check_branch
      %55 = sbr.rel (0) target = $region57
    $region56: #{_mlp_pallas.1} parent=1 // pred_region
      %56 = dma.done [#allocation3], 16
    $region57: #{_mlp_pallas.1} parent=1 // pred_fallthru
      _
    %v58 = vld [vmem:[%s0] sm:$0xff]
    %v59 = vld [vmem:[%s1] sm:$0xff]
    %v60 = vld [vmem:[%s2] sm:$0xf]
    %v61 = vld [vmem:[%s2 + $0x4] sm:$0xf]
    %v62 = vld [vmem:[%s2 + $0x8] sm:$0xf]
    %v63 = vld [vmem:[%s2 + $0xc] sm:$0xf]
    %v64 = vld [vmem:[%s3] sm:$0xf]
    %v65 = vld [vmem:[%s3 + $0x4] sm:$0xf]
    %v66 = vld [vmem:[%s4] sm:$0x1]
    %v67 = vld [vmem:[%s5] sm:$0x1]
    %v68 = vld [vmem:[#allocation2] sm:$0x1]
    %v69 = vpack.c.bf16 %v58, %v58
    %v70 = vpack.c.bf16 %v59, %v59
    %v73 = vunpack.c.l.b16 %v64
    %v74 = vunpack.c.l.b16 %v65
    %v75 = vpack.c.b16 %v74, %v73
    %vm77 = vcmask 130048
    %v79 = vsel %vm77, %v70, 0
    %81 = vmatprep.subr.bf16.mxu0 0
    %82 = vmatpush1.bf16.msra.mxu0 %v75
    %83 = vmatprep.subr.bf16.mxu0 0
    %84 = vmatpush1.bf16.msra.mxu0 0
    %85 = vmatprep.subr.bf16.mxu0 0
    %86 = vmatpush1.bf16.msra.mxu0 0
    %87 = vmatprep.subr.bf16.mxu0 0
    %88 = vmatpush1.bf16.msra.mxu0 0
    %89 = vmatprep.subr.bf16.mxu0 0
    %90 = vmatpush1.bf16.msra.mxu0 0
    %91 = vmatprep.subr.bf16.mxu0 0
    %92 = vmatpush1.bf16.msra.mxu0 0
    %93 = vmatprep.subr.bf16.mxu0 0
    %94 = vmatpush1.bf16.msra.mxu0 0
    %95 = vmatprep.subr.bf16.mxu0 0
    %96 = vmatpush1.bf16.msra.mxu0 0
    %97 = vmatprep.subr.bf16.mxu0 0
    %98 = vmatpush1.bf16.msra.mxu0 0
    %99 = vmatprep.subr.bf16.mxu0 0
    %100 = vmatpush1.bf16.msra.mxu0 0
    %101 = vmatprep.subr.bf16.mxu0 0
    %102 = vmatpush1.bf16.msra.mxu0 0
    %103 = vmatprep.subr.bf16.mxu0 0
    %104 = vmatpush1.bf16.msra.mxu0 0
    %105 = vmatprep.subr.bf16.mxu0 0
    %106 = vmatpush1.bf16.msra.mxu0 0
    %107 = vmatprep.subr.bf16.mxu0 0
    %108 = vmatpush1.bf16.msra.mxu0 0
    %109 = vmatprep.subr.bf16.mxu0 0
    %110 = vmatpush1.bf16.msra.mxu0 0
    %111 = vmatprep.subr.bf16.mxu0 0
    %112 = vmatpush1.bf16.msra.mxu0 0
    %113 = vmatprep.mubr.bf16.mxu0 0
    %114 = vmatmul.mubr.bf16.gmra.mrb[0].mxu0 %v79
    %v115 = vpop.f32.mrb[0].mxu0
    %v116 = vadd.f32 0.0, %v115
    %v117 = vpop.f32.mrb[0].mxu0
    %v118 = vpop.f32.mrb[0].mxu0
    %v119 = vpop.f32.mrb[0].mxu0
    %120 = vdwg.mxu0
    %v125 = vunpack.c.l.b16 %v60
    %v126 = vunpack.c.l.b16 %v61
    %v127 = vunpack.c.l.b16 %v62
    %v128 = vunpack.c.l.b16 %v63
    %v129 = vpack.c.b16 %v126, %v125
    %v130 = vpack.c.b16 %v128, %v127
    %vm133 = vcmask 261120
    %v135 = vsel %vm133, %v69, 0
    %137 = vmatprep.subr.bf16.mxu0 0
    %138 = vmatpush1.bf16.msra.mxu0 %v129
    %139 = vmatprep.subr.bf16.mxu0 0
    %140 = vmatpush1.bf16.msra.mxu0 %v130
    %141 = vmatprep.subr.bf16.mxu0 0
    %142 = vmatpush1.bf16.msra.mxu0 0
    %143 = vmatprep.subr.bf16.mxu0 0
    %144 = vmatpush1.bf16.msra.mxu0 0
    %145 = vmatprep.subr.bf16.mxu0 0
    %146 = vmatpush1.bf16.msra.mxu0 0
    %147 = vmatprep.subr.bf16.mxu0 0
    %148 = vmatpush1.bf16.msra.mxu0 0
    %149 = vmatprep.subr.bf16.mxu0 0
    %150 = vmatpush1.bf16.msra.mxu0 0
    %151 = vmatprep.subr.bf16.mxu0 0
    %152 = vmatpush1.bf16.msra.mxu0 0
    %153 = vmatprep.subr.bf16.mxu0 0
    %154 = vmatpush1.bf16.msra.mxu0 0
    %155 = vmatprep.subr.bf16.mxu0 0
    %156 = vmatpush1.bf16.msra.mxu0 0
    %157 = vmatprep.subr.bf16.mxu0 0
    %158 = vmatpush1.bf16.msra.mxu0 0
    %159 = vmatprep.subr.bf16.mxu0 0
    %160 = vmatpush1.bf16.msra.mxu0 0
    %161 = vmatprep.subr.bf16.mxu0 0
    %162 = vmatpush1.bf16.msra.mxu0 0
    %163 = vmatprep.subr.bf16.mxu0 0
    %164 = vmatpush1.bf16.msra.mxu0 0
    %165 = vmatprep.subr.bf16.mxu0 0
    %166 = vmatpush1.bf16.msra.mxu0 0
    %167 = vmatprep.subr.bf16.mxu0 0
    %168 = vmatpush1.bf16.msra.mxu0 0
    %169 = vmatprep.mubr.bf16.mxu0 0
    %170 = vmatmul.mubr.bf16.gmra.mrb[0].mxu0 %v135
    %v171 = vpop.f32.mrb[0].mxu0
    %v172 = vadd.f32 %v116, %v171
    %v173 = vpop.f32.mrb[0].mxu0
    %v174 = vpop.f32.mrb[0].mxu0
    %v175 = vpop.f32.mrb[0].mxu0
    %176 = vdwg.mxu0
    %v178 = vlaneseq
    %v179 = vshrl.u32 %v178, 7
    %v180 = vsub.s32 0, %v179
    %v181 = vrot.slane %v66, %v180
    %v183 = vadd.f32 %v172, %v181
    %vm184 = vcmask 523264
    %v185 = vsel %vm184, %v183, 0.0
    %186 = vadd.xlane.f32.xlu0 %v185
    %v187 = vpop.xlane.xlu0 %186
    %v188 = vrcp.pop 64.0
    %v189 = vmul.f32 %v187, %v188
    %v190 = vsub.f32 %v183, %v189
    %v191 = vmul.f32 %v190, %v190
    %v192 = vsel %vm184, %v191, 0.0
    %193 = vadd.xlane.f32.xlu0 %v192
    %v194 = vpop.xlane.xlu0 %193
    %v195 = vmul.f32 %v194, %v188
    %v196 = vadd.f32 %v195, 1e-05
    %v197 = vrsqrt.pop %v196
    %v198 = vmul.f32 %v190, %v197
    %v200 = vlaneseq
    %v201 = vshrl.u32 %v200, 7
    %v202 = vsub.s32 0, %v201
    %v203 = vrot.slane %v67, %v202
    %v205 = vmul.f32 %v198, %v203
    %v207 = vlaneseq
    %v208 = vshrl.u32 %v207, 7
    %v209 = vsub.s32 0, %v208
    %v210 = vrot.slane %v68, %v209
    %v212 = vadd.f32 %v205, %v210
    %v213 = vmul.f32 %v212, 0.5
    %v214 = vmul.f32 %v212, 0.70710677
    %v215 = vand.u32 2147483647, %v214
    %v216 = vmul.f32 %v215, 0.3275911
    %v217 = vadd.f32 %v216, 1.0
    %v218 = vrcp.pop %v217
    %v219 = vmul.f32 %v218, 1.0614054
    %v220 = vadd.f32 %v219, -1.4531521
    %v221 = vmul.f32 %v220, %v218
    %v222 = vadd.f32 %v221, 1.4214138
    %v223 = vmul.f32 %v222, %v218
    %v224 = vadd.f32 %v223, -0.28449672
    %v225 = vmul.f32 %v224, %v218
    %v226 = vadd.f32 %v225, 0.2548296
    %v227 = vmul.f32 %v226, %v218
    %v228 = vsub.f32 0.0, %v215
    %v229 = vmul.f32 %v228, %v215
    %v230 = vmul.f32 %v229, 1.442695
    %v231 = vpow.pop %v230
    %v232 = vmul.f32 %v227, %v231
    %v233 = vsub.f32 1.0, %v232
    %vm234 = vcmp.ge.f32.partialorder %v214, 0.0
    %v235 = vsub.f32 0.0, %v233
    %v236 = vsel %vm234, %v233, %v235
    %v237 = vadd.f32 %v236, 1.0
    %v238 = vmul.f32 %v213, %v237
    %v239 = vld [vmem:[%s7] sm:$0xf]
    %v240 = vld [vmem:[%s7 + $0x4] sm:$0xf]
    %v241 = vld [vmem:[%s7 + $0x8] sm:$0xf]
    %v242 = vld [vmem:[%s7 + $0xc] sm:$0xf]
    %v243 = vld [vmem:[%s7 + $0x10] sm:$0xf]
    %v244 = vld [vmem:[%s7 + $0x14] sm:$0xf]
    %v245 = vld [vmem:[%s7 + $0x18] sm:$0xf]
    %v246 = vld [vmem:[%s7 + $0x1c] sm:$0xf]
    %v247 = vld [vmem:[%s8] sm:$0x1]
    %v248 = vld [vmem:[%s9] sm:$0x1]
    %v249 = vld [vmem:[%s10] sm:$0x1]
    %v250 = vpack.c.bf16 %v238, %v238
    %v252 = vlaneseq
    %v253 = vshrl.u32 %v252, 7
    %v254 = vsub.s32 0, %v253
    %v255 = vrot.slane %v247, %v254
    %v265 = vunpack.c.l.b16 %v239
    %v266 = vunpack.c.l.b16 %v240
    %v267 = vunpack.c.l.b16 %v241
    %v268 = vunpack.c.l.b16 %v242
    %v269 = vunpack.c.l.b16 %v243
    %v270 = vunpack.c.l.b16 %v244
    %v271 = vunpack.c.l.b16 %v245
    %v272 = vunpack.c.l.b16 %v246
    %v273 = vpack.c.b16 %v266, %v265
    %v274 = vpack.c.b16 %v268, %v267
    %v275 = vpack.c.b16 %v270, %v269
    %v276 = vpack.c.b16 %v272, %v271
    %v282 = vsel %vm184, %v250, 0
    %284 = vmatprep.subr.bf16.mxu0 0
    %285 = vmatpush1.bf16.msra.mxu0 %v273
    %286 = vmatprep.subr.bf16.mxu0 0
    %287 = vmatpush1.bf16.msra.mxu0 %v274
    %288 = vmatprep.subr.bf16.mxu0 0
    %289 = vmatpush1.bf16.msra.mxu0 %v275
    %290 = vmatprep.subr.bf16.mxu0 0
    %291 = vmatpush1.bf16.msra.mxu0 %v276
    %292 = vmatprep.subr.bf16.mxu0 0
    %293 = vmatpush1.bf16.msra.mxu0 0
    %294 = vmatprep.subr.bf16.mxu0 0
    %295 = vmatpush1.bf16.msra.mxu0 0
    %296 = vmatprep.subr.bf16.mxu0 0
    %297 = vmatpush1.bf16.msra.mxu0 0
    %298 = vmatprep.subr.bf16.mxu0 0
    %299 = vmatpush1.bf16.msra.mxu0 0
    %300 = vmatprep.subr.bf16.mxu0 0
    %301 = vmatpush1.bf16.msra.mxu0 0
    %302 = vmatprep.subr.bf16.mxu0 0
    %303 = vmatpush1.bf16.msra.mxu0 0
    %304 = vmatprep.subr.bf16.mxu0 0
    %305 = vmatpush1.bf16.msra.mxu0 0
    %306 = vmatprep.subr.bf16.mxu0 0
    %307 = vmatpush1.bf16.msra.mxu0 0
    %308 = vmatprep.subr.bf16.mxu0 0
    %309 = vmatpush1.bf16.msra.mxu0 0
    %310 = vmatprep.subr.bf16.mxu0 0
    %311 = vmatpush1.bf16.msra.mxu0 0
    %312 = vmatprep.subr.bf16.mxu0 0
    %313 = vmatpush1.bf16.msra.mxu0 0
    %314 = vmatprep.subr.bf16.mxu0 0
    %315 = vmatpush1.bf16.msra.mxu0 0
    %316 = vmatprep.mubr.bf16.mxu0 0
    %317 = vmatmul.mubr.bf16.gmra.mrb[0].mxu0 %v282
    %v318 = vpop.f32.mrb[0].mxu0
    %v319 = vadd.f32 %v255, %v318
    %v320 = vpop.f32.mrb[0].mxu0
    %v321 = vpop.f32.mrb[0].mxu0
    %v322 = vpop.f32.mrb[0].mxu0
    %323 = vdwg.mxu0
    %v324 = vsel %vm133, %v319, 0.0
    %325 = vadd.xlane.f32.xlu0 %v324
    %v326 = vpop.xlane.xlu0 %325
    %v327 = vrcp.pop 32.0
    %v328 = vmul.f32 %v326, %v327
    %v329 = vsub.f32 %v319, %v328
    %v330 = vmul.f32 %v329, %v329
    %v331 = vsel %vm133, %v330, 0.0
    %332 = vadd.xlane.f32.xlu0 %v331
    %v333 = vpop.xlane.xlu0 %332
    %v334 = vmul.f32 %v333, %v327
    %v335 = vadd.f32 %v334, 1e-05
    %v336 = vrsqrt.pop %v335
    %v337 = vmul.f32 %v329, %v336
    %v339 = vlaneseq
    %v340 = vshrl.u32 %v339, 7
    %v341 = vsub.s32 0, %v340
    %v342 = vrot.slane %v248, %v341
    %v344 = vmul.f32 %v337, %v342
    %v346 = vlaneseq
    %v347 = vshrl.u32 %v346, 7
    %v348 = vsub.s32 0, %v347
    %v349 = vrot.slane %v249, %v348
    %v351 = vadd.f32 %v344, %v349
    %v352 = vmul.f32 %v351, 0.5
    %v353 = vmul.f32 %v351, 0.70710677
    %v354 = vand.u32 2147483647, %v353
    %v355 = vmul.f32 %v354, 0.3275911
    %v356 = vadd.f32 %v355, 1.0
    %v357 = vrcp.pop %v356
    %v358 = vmul.f32 %v357, 1.0614054
    %v359 = vadd.f32 %v358, -1.4531521
    %v360 = vmul.f32 %v359, %v357
    %v361 = vadd.f32 %v360, 1.4214138
    %v362 = vmul.f32 %v361, %v357
    %v363 = vadd.f32 %v362, -0.28449672
    %v364 = vmul.f32 %v363, %v357
    %v365 = vadd.f32 %v364, 0.2548296
    %v366 = vmul.f32 %v365, %v357
    %v367 = vsub.f32 0.0, %v354
    %v368 = vmul.f32 %v367, %v354
    %v369 = vmul.f32 %v368, 1.442695
    %v370 = vpow.pop %v369
    %v371 = vmul.f32 %v366, %v370
    %v372 = vsub.f32 1.0, %v371
    %vm373 = vcmp.ge.f32.partialorder %v353, 0.0
    %v374 = vsub.f32 0.0, %v372
    %v375 = vsel %vm373, %v372, %v374
    %v376 = vadd.f32 %v375, 1.0
    %v377 = vmul.f32 %v352, %v376
    %v378 = vld [vmem:[%s11] sm:$0xf]
    %v379 = vld [vmem:[%s11 + $0x4] sm:$0xf]
    %v380 = vld [vmem:[%s11 + $0x8] sm:$0xf]
    %v381 = vld [vmem:[%s11 + $0xc] sm:$0xf]
    %v382 = vld [vmem:[%s12] sm:$0x1]
    %v383 = vpack.c.bf16 %v377, %v377
    %v385 = vlaneseq
    %v386 = vshrl.u32 %v385, 7
    %v387 = vsub.s32 0, %v386
    %v388 = vrot.slane %v382, %v387
    %v394 = vunpack.c.l.b16 %v378
    %v395 = vunpack.c.l.b16 %v379
    %v396 = vunpack.c.l.b16 %v380
    %v397 = vunpack.c.l.b16 %v381
    %v398 = vpack.c.b16 %v395, %v394
    %v399 = vpack.c.b16 %v397, %v396
    %v403 = vsel %vm133, %v383, 0
    %405 = vmatprep.subr.bf16.mxu0 0
    %406 = vmatpush1.bf16.msra.mxu0 %v398
    %407 = vmatprep.subr.bf16.mxu0 0
    %408 = vmatpush1.bf16.msra.mxu0 %v399
    %409 = vmatprep.subr.bf16.mxu0 0
    %410 = vmatpush1.bf16.msra.mxu0 0
    %411 = vmatprep.subr.bf16.mxu0 0
    %412 = vmatpush1.bf16.msra.mxu0 0
    %413 = vmatprep.subr.bf16.mxu0 0
    %414 = vmatpush1.bf16.msra.mxu0 0
    %415 = vmatprep.subr.bf16.mxu0 0
    %416 = vmatpush1.bf16.msra.mxu0 0
    %417 = vmatprep.subr.bf16.mxu0 0
    %418 = vmatpush1.bf16.msra.mxu0 0
    %419 = vmatprep.subr.bf16.mxu0 0
    %420 = vmatpush1.bf16.msra.mxu0 0
    %421 = vmatprep.subr.bf16.mxu0 0
    %422 = vmatpush1.bf16.msra.mxu0 0
    %423 = vmatprep.subr.bf16.mxu0 0
    %424 = vmatpush1.bf16.msra.mxu0 0
    %425 = vmatprep.subr.bf16.mxu0 0
    %426 = vmatpush1.bf16.msra.mxu0 0
    %427 = vmatprep.subr.bf16.mxu0 0
    %428 = vmatpush1.bf16.msra.mxu0 0
    %429 = vmatprep.subr.bf16.mxu0 0
    %430 = vmatpush1.bf16.msra.mxu0 0
    %431 = vmatprep.subr.bf16.mxu0 0
    %432 = vmatpush1.bf16.msra.mxu0 0
    %433 = vmatprep.subr.bf16.mxu0 0
    %434 = vmatpush1.bf16.msra.mxu0 0
    %435 = vmatprep.subr.bf16.mxu0 0
    %436 = vmatpush1.bf16.msra.mxu0 0
    %437 = vmatprep.mubr.bf16.mxu0 0
    %438 = vmatmul.mubr.bf16.gmra.mrb[0].mxu0 %v403
    %v439 = vpop.f32.mrb[0].mxu0
    %v440 = vadd.f32 %v388, %v439
    %v441 = vpop.f32.mrb[0].mxu0
    %v442 = vpop.f32.mrb[0].mxu0
    %v443 = vpop.f32.mrb[0].mxu0
    %444 = vdwg.mxu0
    %445 = vst.msk [vmem:[#allocation5] sm:$0xff] %vm133, %v440
    // Predicated region
    $region58: #{_mlp_pallas.1} parent=1 // pred_check
      _
    $region59: #{_mlp_pallas.1} parent=1 // pred_check_branch
      %447 = sbr.rel (0) target = $region61
    $region60: #{_mlp_pallas.1} parent=1 // pred_region
      %s449 = ssub.s32 128, 128
      %450 = vsyncadd [#allocation4], %s449
      %s452 = sshll.u32 [#allocation5], 4
      %s453 = int_to_ptr.vmem [resolvable:$true] %s452
      %455 = dma.vmem_to_hbm [thread:$0]  %s453, 128, %s13, [#allocation4]
    $region61: #{_mlp_pallas.1} parent=1 // pred_fallthru
      _
    // Predicated region
    $region62: #{_mlp_pallas.1} parent=1 // pred_check
      _
    $region63: #{_mlp_pallas.1} parent=1 // pred_check_branch
      %457 = sbr.rel (0) target = $region65
    $region64: #{_mlp_pallas.1} parent=1 // pred_region
      %458 = dma.done [#allocation4], 128
    $region65: #{_mlp_pallas.1} parent=1 // pred_fallthru
      _
    %459 = vsyncpa [#allocation3], 1
    %460 = vsyncpa [#allocation4], 1

</llo_original>
